<compile_context>
chip_gen: v7x
topology: tpu7x:2x2x1
jax: 0.10.0
libtpu: 0.0.40
codegen_flags: <defaults>
</compile_context>

<pallas_src>
import jax
import jax.numpy as jnp
from jax.experimental import pallas as pl
from jax.experimental.pallas import tpu as pltpu


def _round_up(x, m):
    return ((x + m - 1) // m) * m


def _cdiv(a, b):
    return -(-a // b)


def iff_kernel(xs_ref, wt_ref, b_ref, out_ref):
    """Fused atomic-predicate evaluation + CLN iff (lane-dense orientation).

    xs_ref : (tm, P*D)  lane-packed samples (P samples per 128-lane row)
    wt_ref : (2P, P*D)  transposed block-diagonal packed weights (resident)
    b_ref  : (2P, 1)    packed bias (resident)
    out_ref: (P, tm)    iff values; out[p, m] belongs to sample m*P + p
    """
    P = out_ref.shape[0]
    # Contract the 128-wide feature axis of BOTH operands (a @ b.T style, same
    # pattern as flash-attention q@k^T) so z lands as (2P, tm): the big tm
    # dimension sits on lanes and all post-matmul work is lane-dense.
    z = jax.lax.dot_general(
        wt_ref[...], xs_ref[...],
        dimension_numbers=(((1,), (1,)), ((), ())),
        preferred_element_type=jnp.float32,
    )                                                 # (2P, tm)
    # sigmoid(2u) = 0.5*tanh(u) + 0.5 ; the 0.5 scale on w/b was folded in the
    # wrapper, so this is a single EUP push per vreg.
    t = jnp.tanh(z + b_ref[...])                      # (2P, tm), in [-1, 1]
    f1 = 0.5 * t[:P, :] + 0.5                         # clause 1, (P, tm)
    f2 = 0.5 * t[P:, :] + 0.5                         # clause 2, (P, tm)

    # tnorm = product; neg(f) = 1 - f; tconorm(a,b) = a + b - a*b
    t_and = f1 * f2
    t_nand = (1.0 - f1) * (1.0 - f2)
    out_ref[...] = t_and + t_nand - t_and * t_nand


def _pack_params(w, b, sharp, P):
    """Fold sharpness B (and the tanh half-angle 0.5) into w/b and build the
    transposed block-diagonal packed weight (2P, P*D) and bias (2P, 1)."""
    w_eff = (0.5 * w * sharp).astype(jnp.float32)               # (D, 2)
    b_eff = (0.5 * b * sharp).reshape(-1).astype(jnp.float32)   # (2,)
    D = w_eff.shape[0]
    eye = jnp.eye(P, dtype=jnp.float32)
    # wt[c*P + q, p*D + d] = (p == q) * w_eff[d, c]
    wt = jnp.einsum("pq,dc->cqpd", eye, w_eff).reshape(2 * P, P * D)
    bt = jnp.repeat(b_eff, P).reshape(2 * P, 1)
    return wt, bt


def _choose_tile(M, tm_max):
    # Small problems: one full-extent block (block dims == array dims, always
    # layout-legal regardless of M's alignment; per-step overhead dominates).
    if M <= 512:
        return M
    # Multi-block: tm is the lane dim of the (P, tm) out block, so it must be
    # a multiple of 128.  Target an even number of grid steps so v7x's two
    # TensorCores split the "parallel" axis evenly (v5e/v6e: single TC).
    steps = _cdiv(M, tm_max)
    if steps % 2:
        steps += 1
    steps = max(steps, 2)
    return min(tm_max, _round_up(_cdiv(M, steps), 128))


def iff_forward(xs, w, b, sharp, *, tm_max=4096):
    N, D = xs.shape
    # Pack P samples per 128-lane row when the feature dim allows it.
    # (If D does not divide 128 we fall back to the correct-but-lane-sparse
    # P = 1 path.)
    P = (128 // D) if (D <= 128 and 128 % D == 0) else 1
    wt, bt = _pack_params(w, b, sharp, P)

    rem = N % P
    if rem:
        # Only copies xs when N is not already a multiple of P (tail samples);
        # no rounding up to the tile size (ragged last block is masked).
        xs = jnp.pad(xs, ((0, P - rem), (0, 0)))
    M = xs.shape[0] // P
    xs_pk = xs.reshape(M, P * D)                      # free reshape, lane-dense

    tm = _choose_tile(M, tm_max)
    grid = (_cdiv(M, tm),)

    out = pl.pallas_call(
        iff_kernel,
        out_shape=jax.ShapeDtypeStruct((P, M), jnp.float32),
        grid_spec=pltpu.PrefetchScalarGridSpec(
            num_scalar_prefetch=0,
            grid=grid,
            in_specs=[
                pl.BlockSpec((tm, P * D), lambda i: (i, 0)),      # xs stream
                pl.BlockSpec((2 * P, P * D), lambda i: (0, 0)),   # weights (resident)
                pl.BlockSpec((2 * P, 1), lambda i: (0, 0)),       # bias (resident)
            ],
            out_specs=pl.BlockSpec((P, tm), lambda i: (0, i)),    # lane-dense out
        ),
        compiler_params=pltpu.CompilerParams(
            dimension_semantics=("parallel",)),
    )(xs_pk, wt, bt)

    # (P, M) -> (N, 1): sample n = m*P + p lives at out[p, m].
    return out.T.reshape(-1, 1)[:N]


def iff_reference(xs, w, b, sharp):
    """Pure-JAX reference mirroring the torch semantics exactly."""
    z = xs @ w + b
    f = jax.nn.sigmoid(sharp * z)
    f1, f2 = f[:, 0:1], f[:, 1:2]
    t_and = f1 * f2
    t_nand = (1.0 - f1) * (1.0 - f2)
    return t_and + t_nand - t_and * t_nand


if __name__ == "__main__":
    key = jax.random.PRNGKey(0)
    k_x, k_w, k_b = jax.random.split(key, 3)

    N, D = 256, 32                       # samples x features (small synthetic)
    xs = jax.random.normal(k_x, (N, D), dtype=jnp.float32)

    # Deterministic subclause parameters (two atomic predicates).
    w = jax.random.normal(k_w, (D, 2), dtype=jnp.float32) * 0.1
    b = jax.random.normal(k_b, (1, 2), dtype=jnp.float32)
    sharp = jnp.full((1, 2), 4.0, dtype=jnp.float32)     # CLN sharpness "B"

    out = jax.block_until_ready(iff_forward(xs, w, b, sharp))
    ref = iff_reference(xs, w, b, sharp)
    assert out.shape == (N, 1)
    assert jnp.allclose(out, ref, atol=1e-5, rtol=1e-5), "mismatch vs reference"

    # Ragged batch (exercises the N % tile handling + tail slice).
    N2 = 100
    xs2 = xs[:N2]
    out2 = jax.block_until_ready(iff_forward(xs2, w, b, sharp))
    ref2 = iff_reference(xs2, w, b, sharp)
    assert out2.shape == (N2, 1)
    assert jnp.allclose(out2, ref2, atol=1e-5, rtol=1e-5), "mismatch (ragged)"

    print("KERNEL_OK")
</pallas_src>

<mosaic_0001>
module attributes {stable_mosaic.version = 11 : i64} {
  func.func @iff_kernel(%arg0: i32, %arg1: memref<64x128xf32, #tpu.memory_space<vmem>>, %arg2: memref<8x128xf32, #tpu.memory_space<vmem>>, %arg3: memref<8x1xf32, #tpu.memory_space<vmem>>, %arg4: memref<4x64xf32, #tpu.memory_space<vmem>>) attributes {dimension_semantics = [#tpu.dimension_semantics<parallel>], iteration_bounds = array<i64: 1>, scalar_prefetch = 0 : i64, scratch_operands = 0 : i64, tpu.core_type = #tpu.core_type<tc>, window_params = [{transform_indices = @transform_0, window_bounds = array<i64: 64, 128>}, {pipeline_mode = #tpu.pipeline_mode<synchronous>, transform_indices = @transform_1, window_bounds = array<i64: 8, 128>}, {pipeline_mode = #tpu.pipeline_mode<synchronous>, transform_indices = @transform_2, window_bounds = array<i64: 8, 1>}, {transform_indices = @transform_3, window_bounds = array<i64: 4, 64>}]} {
    %c0 = arith.constant 0 : index
    %c0_0 = arith.constant 0 : index
    %0 = vector.load %arg2[%c0, %c0_0] : memref<8x128xf32, #tpu.memory_space<vmem>>, vector<8x128xf32>
    %c0_1 = arith.constant 0 : index
    %c0_2 = arith.constant 0 : index
    %1 = vector.load %arg1[%c0_1, %c0_2] : memref<64x128xf32, #tpu.memory_space<vmem>>, vector<64x128xf32>
    %cst = arith.constant dense<0.000000e+00> : vector<8x64xf32>
    %2 = tpu.matmul %0, %1, %cst {dimension_numbers = #tpu.dot_dimension_numbers<[1], [1], [0], [0], [0, 0, 1, 0], [], []>} : vector<8x128xf32>, vector<64x128xf32>, vector<8x64xf32> -> vector<8x64xf32>
    %c0_3 = arith.constant 0 : index
    %c0_4 = arith.constant 0 : index
    %3 = vector.load %arg3[%c0_3, %c0_4] : memref<8x1xf32, #tpu.memory_space<vmem>>, vector<8x1xf32>
    %4 = vector.broadcast %3 : vector<8x1xf32> to vector<8x64xf32>
    %5 = arith.addf %2, %4 : vector<8x64xf32>
    %6 = math.tanh %5 : vector<8x64xf32>
    %7 = vector.extract_strided_slice %6 {offsets = [0, 0], sizes = [4, 64], strides = [1, 1]} : vector<8x64xf32> to vector<4x64xf32>
    %cst_5 = arith.constant 5.000000e-01 : f32
    %8 = vector.broadcast %cst_5 : f32 to vector<4x64xf32>
    %9 = arith.mulf %8, %7 : vector<4x64xf32>
    %cst_6 = arith.constant 5.000000e-01 : f32
    %10 = vector.broadcast %cst_6 : f32 to vector<4x64xf32>
    %11 = arith.addf %9, %10 : vector<4x64xf32>
    %12 = vector.extract_strided_slice %6 {offsets = [4, 0], sizes = [4, 64], strides = [1, 1]} : vector<8x64xf32> to vector<4x64xf32>
    %cst_7 = arith.constant 5.000000e-01 : f32
    %13 = vector.broadcast %cst_7 : f32 to vector<4x64xf32>
    %14 = arith.mulf %13, %12 : vector<4x64xf32>
    %cst_8 = arith.constant 5.000000e-01 : f32
    %15 = vector.broadcast %cst_8 : f32 to vector<4x64xf32>
    %16 = arith.addf %14, %15 : vector<4x64xf32>
    %17 = arith.mulf %11, %16 : vector<4x64xf32>
    %cst_9 = arith.constant 1.000000e+00 : f32
    %18 = vector.broadcast %cst_9 : f32 to vector<4x64xf32>
    %19 = arith.subf %18, %11 : vector<4x64xf32>
    %cst_10 = arith.constant 1.000000e+00 : f32
    %20 = vector.broadcast %cst_10 : f32 to vector<4x64xf32>
    %21 = arith.subf %20, %16 : vector<4x64xf32>
    %22 = arith.mulf %19, %21 : vector<4x64xf32>
    %23 = arith.addf %17, %22 : vector<4x64xf32>
    %24 = arith.mulf %17, %22 : vector<4x64xf32>
    %25 = arith.subf %23, %24 : vector<4x64xf32>
    %c0_11 = arith.constant 0 : index
    %c0_12 = arith.constant 0 : index
    %26 = vector.load %arg4[%c0_11, %c0_12] : memref<4x64xf32, #tpu.memory_space<vmem>>, vector<4x64xf32>
    tpu.vector_store %arg4[%c0_11, %c0_12], %25 {strides = array<i32>} : memref<4x64xf32, #tpu.memory_space<vmem>>, vector<4x64xf32>,
    return
  }
  func.func @transform_0(%arg0: i32) -> (i32, i32) {
    %c0_i32 = arith.constant 0 : i32
    %c0_i32_0 = arith.constant 0 : i32
    return %arg0, %c0_i32 : i32, i32
  }
  func.func @transform_1(%arg0: i32) -> (i32, i32) {
    %c0_i32 = arith.constant 0 : i32
    %c0_i32_0 = arith.constant 0 : i32
    %c0_i32_1 = arith.constant 0 : i32
    return %c0_i32, %c0_i32_0 : i32, i32
  }
  func.func @transform_2(%arg0: i32) -> (i32, i32) {
    %c0_i32 = arith.constant 0 : i32
    %c0_i32_0 = arith.constant 0 : i32
    %c0_i32_1 = arith.constant 0 : i32
    return %c0_i32, %c0_i32_0 : i32, i32
  }
  func.func @transform_3(%arg0: i32) -> (i32, i32) {
    %c0_i32 = arith.constant 0 : i32
    %c0_i32_0 = arith.constant 0 : i32
    return %c0_i32, %arg0 : i32, i32
  }
}

</mosaic_0001>

<llo_original>
// kernel: tpu_custom_call.1
$region0: #{tpu_custom_call.1}
  #allocation0 [shape = 'u32[]', space=smem, size = 0x4, offset = 0x4, fixed_abs, tag = 'smem constant byte address 0x4 - core index']
  #allocation1 [shape = 'u32[144,128]{1,0:T(1,128)}', space=vmem, size = 0x12000, scoped, tag = 'internal scratch']
  %s0 = inlined_call_operand.hbm [shape: f32[64,128], index: 0, kind: input, shape index: {}]
  %s1 = inlined_call_operand.vmem [shape: f32[8,128], index: 1, kind: input, shape index: {}]
  %s2 = inlined_call_operand.vmem [shape: f32[8,1], index: 2, kind: input, shape index: {}]
  %s3 = inlined_call_operand.hbm [shape: f32[4,64], index: 3, kind: output, shape index: {}]
  %s4 = sld [smem:[#allocation0]]
  $region26: #{tpu_custom_call.1} parent=0
    _
  %s6 = ssub.s32 1, %s4
  %s7 = scalar_select 0, %s6, %s4
  $region1: #{tpu_custom_call.1} parent=0
    #allocation2 [shape = 'u8[32768]{0}', space=vmem, size = 0x8000, scoped, tag = 'input window, operand 0, single buffered']
    #allocation3 [shape = 's32[1]{0}', space=sflag, size = 0x4, scoped, tag = 'scoped memory for tpu_custom_call.1']
    #allocation4 [shape = 's32[1]{0}', space=sflag, size = 0x4, scoped, tag = 'scoped memory for tpu_custom_call.1']
    #allocation5 [shape = 'u8[2048]{0}', space=vmem, size = 0x800, scoped, tag = 'output window, operand 0, single buffered']
    %8 = vsyncpa [#allocation3], 0
    %9 = vsyncpa [#allocation4], 0
    // Predicated region
    $region2: #{tpu_custom_call.1} parent=1 // pred_check
      _
    $region3: #{tpu_custom_call.1} parent=1 // pred_check_branch
      %11 = sbr.rel (0) target = $region5
    $region4: #{tpu_custom_call.1} parent=1 // pred_region
      %s13 = ssub.s32 1024, 1024
      %14 = vsyncadd [#allocation3], %s13
      %s15 = sshll.u32 [#allocation2], 4
      %s16 = int_to_ptr.vmem [resolvable:$true] %s15
      %21 = dma.hbm_to_vmem [thread:$0]  %s0, 1024, %s16, [#allocation3], 128, 128, 8
    $region5: #{tpu_custom_call.1} parent=1 // pred_fallthru
      _
    // Predicated region
    $region6: #{tpu_custom_call.1} parent=1 // pred_check
      _
    $region7: #{tpu_custom_call.1} parent=1 // pred_check_branch
      %23 = sbr.rel (0) target = $region9
    $region8: #{tpu_custom_call.1} parent=1 // pred_region
      _
    $region9: #{tpu_custom_call.1} parent=1 // pred_fallthru
      _
    // Predicated region
    $region10: #{tpu_custom_call.1} parent=1 // pred_check
      _
    $region11: #{tpu_custom_call.1} parent=1 // pred_check_branch
      %25 = sbr.rel (0) target = $region13
    $region12: #{tpu_custom_call.1} parent=1 // pred_region
      _
    $region13: #{tpu_custom_call.1} parent=1 // pred_fallthru
      _
    // Predicated region
    $region14: #{tpu_custom_call.1} parent=1 // pred_check
      _
    $region15: #{tpu_custom_call.1} parent=1 // pred_check_branch
      %27 = sbr.rel (0) target = $region17
    $region16: #{tpu_custom_call.1} parent=1 // pred_region
      %28 = dma.done [#allocation3], 1024
    $region17: #{tpu_custom_call.1} parent=1 // pred_fallthru
      _
    %v29 = vld [vmem:[%s1] sm:$0xff]
    %v30 = vld [vmem:[#allocation2] sm:$0xff]
    %v31 = vld [vmem:[#allocation2 + $0x8] sm:$0xff]
    %v32 = vld [vmem:[#allocation2 + $0x10] sm:$0xff]
    %v33 = vld [vmem:[#allocation2 + $0x18] sm:$0xff]
    %v34 = vld [vmem:[#allocation2 + $0x20] sm:$0xff]
    %v35 = vld [vmem:[#allocation2 + $0x28] sm:$0xff]
    %v36 = vld [vmem:[#allocation2 + $0x30] sm:$0xff]
    %v37 = vld [vmem:[#allocation2 + $0x38] sm:$0xff]
    %v38 = vld [vmem:[%s2] sm:$0xff]
    %40 = vset.pattern.permute.xlu0 0
    %41 = vperm.xlu0 %40, %v38
    %v42 = vpop.permute.xlu0 %41
    %44 = vmatprep.subr.mxu0 0.0
    %45 = vmatpush1.xpose.msra.mxu0 %v30
    %46 = vmatprep.subr.mxu0 0.0
    %47 = vmatpush1.xpose.msra.mxu0 %v31
    %48 = vmatprep.subr.mxu0 0.0
    %49 = vmatpush1.xpose.msra.mxu0 %v32
    %50 = vmatprep.subr.mxu0 0.0
    %51 = vmatpush1.xpose.msra.mxu0 %v33
    %52 = vmatprep.subr.mxu0 0.0
    %53 = vmatpush1.xpose.msra.mxu0 %v34
    %54 = vmatprep.subr.mxu0 0.0
    %55 = vmatpush1.xpose.msra.mxu0 %v35
    %56 = vmatprep.subr.mxu0 0.0
    %57 = vmatpush1.xpose.msra.mxu0 %v36
    %58 = vmatprep.subr.mxu0 0.0
    %59 = vmatpush1.xpose.msra.mxu0 %v37
    %60 = vmatprep.subr.mxu0 0.0
    %61 = vmatpush1.xpose.msra.mxu0 0.0
    %62 = vmatprep.subr.mxu0 0.0
    %63 = vmatpush1.xpose.msra.mxu0 0.0
    %64 = vmatprep.subr.mxu0 0.0
    %65 = vmatpush1.xpose.msra.mxu0 0.0
    %66 = vmatprep.subr.mxu0 0.0
    %67 = vmatpush1.xpose.msra.mxu0 0.0
    %68 = vmatprep.subr.mxu0 0.0
    %69 = vmatpush1.xpose.msra.mxu0 0.0
    %70 = vmatprep.subr.mxu0 0.0
    %71 = vmatpush1.xpose.msra.mxu0 0.0
    %72 = vmatprep.subr.mxu0 0.0
    %73 = vmatpush1.xpose.msra.mxu0 0.0
    %74 = vmatprep.subr.mxu0 0.0
    %75 = vmatpush1.xpose.msra.mxu0 0.0
    %76 = vmatprep.subr.mxu0 0.0
    %77 = vmatpush1.xpose.msra.mxu0 0.0
    %78 = vmatprep.subr.mxu0 0.0
    %79 = vmatpush1.xpose.msra.mxu0 0.0
    %80 = vmatprep.subr.mxu0 0.0
    %81 = vmatpush1.xpose.msra.mxu0 0.0
    %82 = vmatprep.subr.mxu0 0.0
    %83 = vmatpush1.xpose.msra.mxu0 0.0
    %84 = vmatprep.subr.mxu0 0.0
    %85 = vmatpush1.xpose.msra.mxu0 0.0
    %86 = vmatprep.subr.mxu0 0.0
    %87 = vmatpush1.xpose.msra.mxu0 0.0
    %88 = vmatprep.subr.mxu0 0.0
    %89 = vmatpush1.xpose.msra.mxu0 0.0
    %90 = vmatprep.subr.mxu0 0.0
    %91 = vmatpush1.xpose.msra.mxu0 0.0
    %92 = vmatprep.subr.mxu0 0.0
    %93 = vmatpush1.xpose.msra.mxu0 0.0
    %94 = vmatprep.subr.mxu0 0.0
    %95 = vmatpush1.xpose.msra.mxu0 0.0
    %96 = vmatprep.subr.mxu0 0.0
    %97 = vmatpush1.xpose.msra.mxu0 0.0
    %98 = vmatprep.subr.mxu0 0.0
    %99 = vmatpush1.xpose.msra.mxu0 0.0
    %100 = vmatprep.subr.mxu0 0.0
    %101 = vmatpush1.xpose.msra.mxu0 0.0
    %102 = vmatprep.subr.mxu0 0.0
    %103 = vmatpush1.xpose.msra.mxu0 0.0
    %104 = vmatprep.subr.mxu0 0.0
    %105 = vmatpush1.xpose.msra.mxu0 0.0
    %106 = vmatprep.subr.mxu0 0.0
    %107 = vmatpush1.xpose.msra.mxu0 0.0
    %108 = vmatprep.mubr.f32.mxu0 0.0
    %109 = vmatmul.mubr.f32.gmra.mrb[0].mxu0 %v29
    %v110 = vpop.f32.mrb[0].mxu0
    %v111 = vadd.f32 %v42, %v110
    %v112 = vpop.f32.mrb[0].mxu0
    %113 = vdwg.mxu0
    %v114 = vtanh.pop %v111
    %v115 = vmul.f32 %v114, 0.5
    %v116 = vadd.f32 %v115, 0.5
    %v118 = vrot.slane %v116, 4
    %v120 = vmul.f32 %v116, %v118
    %v121 = vsub.f32 1.0, %v116
    %v123 = vrot.slane %v121, 4
    %v125 = vmul.f32 %v121, %v123
    %v126 = vadd.f32 %v120, %v125
    %v127 = vmul.f32 %v120, %v125
    %v128 = vsub.f32 %v126, %v127
    %vm129 = vcmask 519168
    %130 = vst.msk [vmem:[#allocation5] sm:$0xf] %vm129, %v128
    // Predicated region
    $region18: #{tpu_custom_call.1} parent=1 // pred_check
      _
    $region19: #{tpu_custom_call.1} parent=1 // pred_check_branch
      %132 = sbr.rel (0) target = $region21
    $region20: #{tpu_custom_call.1} parent=1 // pred_region
      %s134 = ssub.s32 64, 64
      %135 = vsyncadd [#allocation4], %s134
      %s137 = sshll.u32 [#allocation5], 4
      %s138 = int_to_ptr.vmem [resolvable:$true] %s137
      %140 = dma.vmem_to_hbm [thread:$0]  %s138, 64, %s3, [#allocation4]
    $region21: #{tpu_custom_call.1} parent=1 // pred_fallthru
      _
    // Predicated region
    $region22: #{tpu_custom_call.1} parent=1 // pred_check
      _
    $region23: #{tpu_custom_call.1} parent=1 // pred_check_branch
      %142 = sbr.rel (0) target = $region25
    $region24: #{tpu_custom_call.1} parent=1 // pred_region
      %143 = dma.done [#allocation4], 64
    $region25: #{tpu_custom_call.1} parent=1 // pred_fallthru
      _
    %144 = vsyncpa [#allocation3], 1
    %145 = vsyncpa [#allocation4], 1

</llo_original>
